<compile_context>
chip_gen: v7x
topology: tpu7x:2x2x1
jax: 0.10.0
libtpu: 0.0.40
codegen_flags: <defaults>
</compile_context>

<pallas_src>
import jax
import jax.numpy as jnp
from jax.experimental import pallas as pl
from jax.experimental.pallas import tpu as pltpu

HIDDEN = 512


def _a2c_kernel(x_ref, w1_ref, b1_ref, w2_ref, b2_ref, out_ref):
    # Layer 1 (both heads fused). Cast x to the MXU operand dtype in-kernel.
    x = x_ref[...].astype(w1_ref.dtype)
    h = jnp.dot(x, w1_ref[...], preferred_element_type=jnp.float32)
    h = jnp.maximum(h + b1_ref[...], 0.0)          # bias + ReLU in f32 (VPU)

    # Layer 2: block-diagonal W2 (policy | value), bias added on the VPU.
    out = jnp.dot(h.astype(w2_ref.dtype), w2_ref[...],
                  preferred_element_type=jnp.float32)
    out_ref[...] = out + b2_ref[...]


def linear_a2c_forward(x, packed, tb=256):
    """x: [B, D] (any float dtype). packed: dict from pack_params.
    Returns (policy [B, A], value [B, 1]) as f32 — matches LinearA2C.forward."""
    B, D = x.shape
    A = packed["n_actions"]
    w1, b1 = packed["w1"], packed["b1"]
    w2, b2 = packed["w2"], packed["b2"]
    H2 = w1.shape[1]
    NPAD = w2.shape[1]

    # Batch tiling: single block at small B; TB-row tiles (multiple of 256
    # fills the 256-row MXU on v6e/v7x) for large / vectorized-env batches.
    TB = B if B <= tb else tb
    n_tiles = -(-B // TB)
    Bp = n_tiles * TB

    xin = x.astype(jnp.float32)          # fx = x.float() (no-op if already f32)
    if Bp != B:
        xin = jnp.pad(xin, ((0, Bp - B), (0, 0)))

    out = pl.pallas_call(
        _a2c_kernel,
        out_shape=jax.ShapeDtypeStruct((Bp, NPAD), jnp.float32),
        grid=(n_tiles,),
        in_specs=[
            pl.BlockSpec((TB, D), lambda i: (i, 0)),     # x tile
            pl.BlockSpec((D, H2), lambda i: (0, 0)),     # W1 slab (resident)
            pl.BlockSpec((1, H2), lambda i: (0, 0)),     # b1 row  (resident)
            pl.BlockSpec((H2, NPAD), lambda i: (0, 0)),  # W2 slab (resident)
            pl.BlockSpec((1, NPAD), lambda i: (0, 0)),   # b2 row  (resident)
        ],
        out_specs=pl.BlockSpec((TB, NPAD), lambda i: (i, 0)),
        compiler_params=pltpu.CompilerParams(
            dimension_semantics=("parallel",)),
    )(xin, w1, b1, w2, b2)

    return out[:B, :A], out[:B, A:A + 1]


def init_params(key, input_dim, n_actions, hidden=HIDDEN):
    """PyTorch nn.Linear-style init (uniform(-1/sqrt(fan_in), 1/sqrt(fan_in))).
    Weights stored as [in_features, out_features]; biases as [1, out_features]."""
    def linear(k, fan_in, fan_out):
        kw, kb = jax.random.split(k)
        bound = 1.0 / jnp.sqrt(jnp.float32(fan_in))
        w = jax.random.uniform(kw, (fan_in, fan_out), jnp.float32, -bound, bound)
        b = jax.random.uniform(kb, (1, fan_out), jnp.float32, -bound, bound)
        return w, b

    k1, k2, k3, k4 = jax.random.split(key, 4)
    pw1, pb1 = linear(k1, input_dim, hidden)
    pw2, pb2 = linear(k2, hidden, n_actions)
    vw1, vb1 = linear(k3, input_dim, hidden)
    vw2, vb2 = linear(k4, hidden, 1)
    return {
        "pw1": pw1, "pb1": pb1, "pw2": pw2, "pb2": pb2,
        "vw1": vw1, "vb1": vb1, "vw2": vw2, "vb2": vb2,
    }


def pack_params(params, dtype=jnp.bfloat16):
    """Pack the 8 per-head tensors into two aligned fused slabs + f32 bias rows."""
    pw1, pb1 = params["pw1"], params["pb1"]
    vw1, vb1 = params["vw1"], params["vb1"]
    pw2, pb2 = params["pw2"], params["pb2"]
    vw2, vb2 = params["vw2"], params["vb2"]

    D, H = pw1.shape
    A = pw2.shape[1]
    H2 = 2 * H
    NPAD = max(128, -(-(A + 1) // 128) * 128)   # lane-dense output width

    # Layer-1 slab [D, 2H] (no bias row, no ones column) + f32 bias row.
    w1 = jnp.concatenate([pw1, vw1], axis=1)
    b1 = jnp.concatenate([pb1, vb1], axis=1)

    # Layer-2 block-diagonal slab [2H, NPAD] + f32 bias row [1, NPAD].
    w2 = jnp.zeros((H2, NPAD), jnp.float32)
    w2 = w2.at[:H, :A].set(pw2)
    w2 = w2.at[H:H2, A:A + 1].set(vw2)
    b2 = jnp.zeros((1, NPAD), jnp.float32)
    b2 = b2.at[0, :A].set(pb2[0])
    b2 = b2.at[0, A].set(vb2[0, 0])

    return {
        "w1": w1.astype(dtype), "b1": b1.astype(jnp.float32),
        "w2": w2.astype(dtype), "b2": b2.astype(jnp.float32),
        "n_actions": A,
    }


if __name__ == "__main__":
    # CartPole-like: input_shape = (4,), n_actions = 2, small batch.
    B, D, A = 8, 4, 2

    key = jax.random.PRNGKey(0)
    k_params, k_x = jax.random.split(key)

    params = init_params(k_params, D, A)
    packed = pack_params(params)
    x = jax.random.normal(k_x, (B, D), dtype=jnp.float32)

    policy, value = linear_a2c_forward(x, packed)
    jax.block_until_ready((policy, value))
    assert policy.shape == (B, A) and value.shape == (B, 1)

    # Reference 1: same bf16-rounded slabs, plain-JAX f32 math (tight check of
    # the fused kernel math itself).
    w1f = packed["w1"].astype(jnp.float32)
    w2f = packed["w2"].astype(jnp.float32)
    x_r = x.astype(jnp.bfloat16).astype(jnp.float32)
    h_r = jnp.maximum(x_r @ w1f + packed["b1"], 0.0)
    h_r = h_r.astype(jnp.bfloat16).astype(jnp.float32)
    out_r = h_r @ w2f + packed["b2"]
    assert jnp.allclose(policy, out_r[:, :A], atol=1e-2, rtol=1e-2)
    assert jnp.allclose(value, out_r[:, A:A + 1], atol=1e-2, rtol=1e-2)

    # Reference 2: original full-precision module math (loose tolerance due to
    # bf16 MXU operands).
    ph = jnp.maximum(x @ params["pw1"] + params["pb1"], 0.0)
    policy_f32 = ph @ params["pw2"] + params["pb2"]
    vh = jnp.maximum(x @ params["vw1"] + params["vb1"], 0.0)
    value_f32 = vh @ params["vw2"] + params["vb2"]
    assert jnp.allclose(policy, policy_f32, atol=5e-2, rtol=5e-2)
    assert jnp.allclose(value, value_f32, atol=5e-2, rtol=5e-2)

    print("KERNEL_OK")
</pallas_src>

<mosaic_0001>
module attributes {stable_mosaic.version = 11 : i64} {
  func.func @_a2c_kernel(%arg0: i32, %arg1: memref<8x4xf32, #tpu.memory_space<vmem>>, %arg2: memref<4x1024xbf16, #tpu.memory_space<vmem>>, %arg3: memref<1x1024xf32, #tpu.memory_space<vmem>>, %arg4: memref<1024x128xbf16, #tpu.memory_space<vmem>>, %arg5: memref<1x128xf32, #tpu.memory_space<vmem>>, %arg6: memref<8x128xf32, #tpu.memory_space<vmem>>) attributes {dimension_semantics = [#tpu.dimension_semantics<parallel>], iteration_bounds = array<i64: 1>, scalar_prefetch = 0 : i64, scratch_operands = 0 : i64, tpu.core_type = #tpu.core_type<tc>, window_params = [{transform_indices = @transform_0, window_bounds = array<i64: 8, 4>}, {pipeline_mode = #tpu.pipeline_mode<synchronous>, transform_indices = @transform_1, window_bounds = array<i64: 4, 1024>}, {pipeline_mode = #tpu.pipeline_mode<synchronous>, transform_indices = @transform_2, window_bounds = array<i64: 1, 1024>}, {pipeline_mode = #tpu.pipeline_mode<synchronous>, transform_indices = @transform_3, window_bounds = array<i64: 1024, 128>}, {pipeline_mode = #tpu.pipeline_mode<synchronous>, transform_indices = @transform_4, window_bounds = array<i64: 1, 128>}, {transform_indices = @transform_5, window_bounds = array<i64: 8, 128>}]} {
    %c0 = arith.constant 0 : index
    %c0_0 = arith.constant 0 : index
    %0 = vector.load %arg1[%c0, %c0_0] : memref<8x4xf32, #tpu.memory_space<vmem>>, vector<8x4xf32>
    %1 = arith.truncf %0 : vector<8x4xf32> to vector<8x4xbf16>
    %c0_1 = arith.constant 0 : index
    %c0_2 = arith.constant 0 : index
    %2 = vector.load %arg2[%c0_1, %c0_2] : memref<4x1024xbf16, #tpu.memory_space<vmem>>, vector<4x1024xbf16>
    %cst = arith.constant dense<0.000000e+00> : vector<8x1024xf32>
    %3 = tpu.matmul %1, %2, %cst {dimension_numbers = #tpu.dot_dimension_numbers<[1], [0], [0], [1], [0, 0, 1, 1], [], []>} : vector<8x4xbf16>, vector<4x1024xbf16>, vector<8x1024xf32> -> vector<8x1024xf32>
    %c0_3 = arith.constant 0 : index
    %c0_4 = arith.constant 0 : index
    %4 = vector.load %arg3[%c0_3, %c0_4] : memref<1x1024xf32, #tpu.memory_space<vmem>>, vector<1x1024xf32>
    %5 = vector.broadcast %4 : vector<1x1024xf32> to vector<8x1024xf32>
    %6 = arith.addf %3, %5 : vector<8x1024xf32>
    %cst_5 = arith.constant 0.000000e+00 : f32
    %7 = vector.broadcast %cst_5 : f32 to vector<8x1024xf32>
    %8 = arith.maximumf %6, %7 : vector<8x1024xf32>
    %9 = arith.truncf %8 : vector<8x1024xf32> to vector<8x1024xbf16>
    %c0_6 = arith.constant 0 : index
    %c0_7 = arith.constant 0 : index
    %10 = vector.load %arg4[%c0_6, %c0_7] : memref<1024x128xbf16, #tpu.memory_space<vmem>>, vector<1024x128xbf16>
    %cst_8 = arith.constant dense<0.000000e+00> : vector<8x128xf32>
    %11 = tpu.matmul %9, %10, %cst_8 {dimension_numbers = #tpu.dot_dimension_numbers<[1], [0], [0], [1], [0, 0, 1, 1], [], []>} : vector<8x1024xbf16>, vector<1024x128xbf16>, vector<8x128xf32> -> vector<8x128xf32>
    %c0_9 = arith.constant 0 : index
    %c0_10 = arith.constant 0 : index
    %12 = vector.load %arg5[%c0_9, %c0_10] : memref<1x128xf32, #tpu.memory_space<vmem>>, vector<1x128xf32>
    %13 = vector.broadcast %12 : vector<1x128xf32> to vector<8x128xf32>
    %14 = arith.addf %11, %13 : vector<8x128xf32>
    %c0_11 = arith.constant 0 : index
    %c0_12 = arith.constant 0 : index
    %15 = vector.load %arg6[%c0_11, %c0_12] : memref<8x128xf32, #tpu.memory_space<vmem>>, vector<8x128xf32>
    tpu.vector_store %arg6[%c0_11, %c0_12], %14 {strides = array<i32>} : memref<8x128xf32, #tpu.memory_space<vmem>>, vector<8x128xf32>,
    return
  }
  func.func @transform_0(%arg0: i32) -> (i32, i32) {
    %c0_i32 = arith.constant 0 : i32
    %c0_i32_0 = arith.constant 0 : i32
    return %arg0, %c0_i32 : i32, i32
  }
  func.func @transform_1(%arg0: i32) -> (i32, i32) {
    %c0_i32 = arith.constant 0 : i32
    %c0_i32_0 = arith.constant 0 : i32
    %c0_i32_1 = arith.constant 0 : i32
    return %c0_i32, %c0_i32_0 : i32, i32
  }
  func.func @transform_2(%arg0: i32) -> (i32, i32) {
    %c0_i32 = arith.constant 0 : i32
    %c0_i32_0 = arith.constant 0 : i32
    %c0_i32_1 = arith.constant 0 : i32
    return %c0_i32, %c0_i32_0 : i32, i32
  }
  func.func @transform_3(%arg0: i32) -> (i32, i32) {
    %c0_i32 = arith.constant 0 : i32
    %c0_i32_0 = arith.constant 0 : i32
    %c0_i32_1 = arith.constant 0 : i32
    return %c0_i32, %c0_i32_0 : i32, i32
  }
  func.func @transform_4(%arg0: i32) -> (i32, i32) {
    %c0_i32 = arith.constant 0 : i32
    %c0_i32_0 = arith.constant 0 : i32
    %c0_i32_1 = arith.constant 0 : i32
    return %c0_i32, %c0_i32_0 : i32, i32
  }
  func.func @transform_5(%arg0: i32) -> (i32, i32) {
    %c0_i32 = arith.constant 0 : i32
    %c0_i32_0 = arith.constant 0 : i32
    return %arg0, %c0_i32 : i32, i32
  }
}

</mosaic_0001>

<llo_original>
// kernel: tpu_custom_call.1
$region0: #{tpu_custom_call.1}
  #allocation0 [shape = 'u32[]', space=smem, size = 0x4, offset = 0x4, fixed_abs, tag = 'smem constant byte address 0x4 - core index']
  #allocation1 [shape = 'u32[144,128]{1,0:T(1,128)}', space=vmem, size = 0x12000, scoped, tag = 'internal scratch']
  %s0 = inlined_call_operand.vmem [shape: f32[8,4], index: 0, kind: input, shape index: {}]
  %s1 = inlined_call_operand.hbm [shape: bf16[4,1024], index: 1, kind: input, shape index: {}]
  %s2 = inlined_call_operand.vmem [shape: f32[1,1024], index: 2, kind: input, shape index: {}]
  %s3 = inlined_call_operand.hbm [shape: bf16[1024,128], index: 3, kind: input, shape index: {}]
  %s4 = inlined_call_operand.vmem [shape: f32[1,128], index: 4, kind: input, shape index: {}]
  %s5 = inlined_call_operand.hbm [shape: f32[8,128], index: 5, kind: output, shape index: {}]
  %s6 = sld [smem:[#allocation0]]
  $region38: #{tpu_custom_call.1} parent=0
    _
  %s8 = ssub.s32 1, %s6
  %s9 = scalar_select 0, %s8, %s6
  $region1: #{tpu_custom_call.1} parent=0
    #allocation2 [shape = 'u8[8192]{0}', space=vmem, size = 0x2000, scoped, tag = 'input window, operand 1, single buffered']
    #allocation3 [shape = 's32[1]{0}', space=sflag, size = 0x4, scoped, tag = 'scoped memory for tpu_custom_call.1']
    #allocation4 [shape = 's32[1]{0}', space=sflag, size = 0x4, scoped, tag = 'scoped memory for tpu_custom_call.1']
    #allocation5 [shape = 'u8[262144]{0}', space=vmem, size = 0x40000, scoped, tag = 'input window, operand 3, single buffered']
    #allocation6 [shape = 's32[1]{0}', space=sflag, size = 0x4, scoped, tag = 'scoped memory for tpu_custom_call.1']
    #allocation7 [shape = 'u8[4096]{0}', space=vmem, size = 0x1000, scoped, tag = 'output window, operand 0, single buffered']
    %10 = vsyncpa [#allocation3], 0
    %11 = vsyncpa [#allocation6], 0
    %12 = vsyncpa [#allocation4], 0
    // Predicated region
    $region2: #{tpu_custom_call.1} parent=1 // pred_check
      _
    $region3: #{tpu_custom_call.1} parent=1 // pred_check_branch
      %14 = sbr.rel (0) target = $region5
    $region4: #{tpu_custom_call.1} parent=1 // pred_region
      _
    $region5: #{tpu_custom_call.1} parent=1 // pred_fallthru
      _
    // Predicated region
    $region6: #{tpu_custom_call.1} parent=1 // pred_check
      _
    $region7: #{tpu_custom_call.1} parent=1 // pred_check_branch
      %16 = sbr.rel (0) target = $region9
    $region8: #{tpu_custom_call.1} parent=1 // pred_region
      %s18 = ssub.s32 256, 256
      %19 = vsyncadd [#allocation3], %s18
      %s21 = sshll.u32 [#allocation2], 4
      %s22 = int_to_ptr.vmem [resolvable:$true] %s21
      %24 = dma.hbm_to_vmem [thread:$0]  %s1, 256, %s22, [#allocation3]
    $region9: #{tpu_custom_call.1} parent=1 // pred_fallthru
      _
    // Predicated region
    $region10: #{tpu_custom_call.1} parent=1 // pred_check
      _
    $region11: #{tpu_custom_call.1} parent=1 // pred_check_branch
      %26 = sbr.rel (0) target = $region13
    $region12: #{tpu_custom_call.1} parent=1 // pred_region
      _
    $region13: #{tpu_custom_call.1} parent=1 // pred_fallthru
      _
    // Predicated region
    $region14: #{tpu_custom_call.1} parent=1 // pred_check
      _
    $region15: #{tpu_custom_call.1} parent=1 // pred_check_branch
      %28 = sbr.rel (0) target = $region17
    $region16: #{tpu_custom_call.1} parent=1 // pred_region
      %s30 = ssub.s32 8192, 8192
      %31 = vsyncadd [#allocation6], %s30
      %s32 = sshll.u32 [#allocation5], 4
      %s33 = int_to_ptr.vmem [resolvable:$true] %s32
      %38 = dma.hbm_to_vmem [thread:$0]  %s3, 8192, %s33, [#allocation6], 64, 64, 4
    $region17: #{tpu_custom_call.1} parent=1 // pred_fallthru
      _
    // Predicated region
    $region18: #{tpu_custom_call.1} parent=1 // pred_check
      _
    $region19: #{tpu_custom_call.1} parent=1 // pred_check_branch
      %40 = sbr.rel (0) target = $region21
    $region20: #{tpu_custom_call.1} parent=1 // pred_region
      _
    $region21: #{tpu_custom_call.1} parent=1 // pred_fallthru
      _
    // Predicated region
    $region22: #{tpu_custom_call.1} parent=1 // pred_check
      _
    $region23: #{tpu_custom_call.1} parent=1 // pred_check_branch
      %42 = sbr.rel (0) target = $region25
    $region24: #{tpu_custom_call.1} parent=1 // pred_region
      %43 = dma.done [#allocation3], 256
    $region25: #{tpu_custom_call.1} parent=1 // pred_fallthru
      _
    // Predicated region
    $region26: #{tpu_custom_call.1} parent=1 // pred_check
      _
    $region27: #{tpu_custom_call.1} parent=1 // pred_check_branch
      %45 = sbr.rel (0) target = $region29
    $region28: #{tpu_custom_call.1} parent=1 // pred_region
      %46 = dma.done [#allocation6], 8192
    $region29: #{tpu_custom_call.1} parent=1 // pred_fallthru
      _
    %v48 = vld [vmem:[%s0] sm:$0xff]
    %v49 = vpack.c.bf16 %v48, %v48
    %v50 = vld [vmem:[#allocation2] sm:$0xff]
    %v51 = vld [vmem:[#allocation2 + $0x8] sm:$0xff]
    %v52 = vld [vmem:[%s2] sm:$0xff]
    %v54 = vlaneseq
    %v55 = vshrl.u32 %v54, 7
    %v56 = vsub.s32 0, %v55
    %v57 = vrot.slane %v52, %v56
    %v58 = vlaneseq
    %v59 = vshrl.u32 %v58, 7
    %v60 = vsub.s32 1, %v59
    %v61 = vrot.slane %v52, %v60
    %v62 = vlaneseq
    %v63 = vshrl.u32 %v62, 7
    %v64 = vsub.s32 2, %v63
    %v65 = vrot.slane %v52, %v64
    %v66 = vlaneseq
    %v67 = vshrl.u32 %v66, 7
    %v68 = vsub.s32 3, %v67
    %v69 = vrot.slane %v52, %v68
    %v70 = vlaneseq
    %v71 = vshrl.u32 %v70, 7
    %v72 = vsub.s32 4, %v71
    %v73 = vrot.slane %v52, %v72
    %v74 = vlaneseq
    %v75 = vshrl.u32 %v74, 7
    %v76 = vsub.s32 5, %v75
    %v77 = vrot.slane %v52, %v76
    %v78 = vlaneseq
    %v79 = vshrl.u32 %v78, 7
    %v80 = vsub.s32 6, %v79
    %v81 = vrot.slane %v52, %v80
    %v82 = vlaneseq
    %v83 = vshrl.u32 %v82, 7
    %v84 = vsub.s32 7, %v83
    %v85 = vrot.slane %v52, %v84
    %v96 = vcombine.high %v50, %v50
    %v98 = vunpack.c.l.s4 1983009808
    %v99 = vunpack.c.0.s8 %v98
    %v100 = vlaneseq
    %v101 = vshrl.u32 %v100, 7
    %v102 = vsub.s32 %v99, %v101
    %v103 = vrot.slane %v50, %v102
    %v105 = vunpack.c.l.s4 1983009808
    %v106 = vunpack.c.0.s8 %v105
    %v107 = vlaneseq
    %v108 = vshrl.u32 %v107, 7
    %v109 = vsub.s32 %v106, %v108
    %v110 = vrot.slane %v96, %v109
    %v111 = vcombine.high %v103, %v103
    %v112 = vcombine.high %v110, %v110
    %v113 = vcombine.high %v51, %v51
    %v115 = vunpack.c.l.s4 1983009808
    %v116 = vunpack.c.0.s8 %v115
    %v117 = vlaneseq
    %v118 = vshrl.u32 %v117, 7
    %v119 = vsub.s32 %v116, %v118
    %v120 = vrot.slane %v51, %v119
    %v122 = vunpack.c.l.s4 1983009808
    %v123 = vunpack.c.0.s8 %v122
    %v124 = vlaneseq
    %v125 = vshrl.u32 %v124, 7
    %v126 = vsub.s32 %v123, %v125
    %v127 = vrot.slane %v113, %v126
    %v128 = vcombine.high %v120, %v120
    %v129 = vcombine.high %v127, %v127
    %vm130 = vcmask 31744
    %v132 = vsel %vm130, %v49, 0
    %vm134 = vcmask 1041408
    %v136 = vsel %vm134, %v103, 0
    %v139 = vsel %vm134, %v111, 0
    %v142 = vsel %vm134, %v110, 0
    %v145 = vsel %vm134, %v112, 0
    %v148 = vsel %vm134, %v120, 0
    %v151 = vsel %vm134, %v128, 0
    %v154 = vsel %vm134, %v127, 0
    %v157 = vsel %vm134, %v129, 0
    %159 = vmatprep.subr.bf16.mxu0 %v139
    %160 = vmatpush1.bf16.msra.mxu0 %v136
    %161 = vmatprep.subr.bf16.mxu0 0
    %162 = vmatpush1.bf16.msra.mxu0 0
    %163 = vmatprep.subr.bf16.mxu0 0
    %164 = vmatpush1.bf16.msra.mxu0 0
    %165 = vmatprep.subr.bf16.mxu0 0
    %166 = vmatpush1.bf16.msra.mxu0 0
    %167 = vmatprep.subr.bf16.mxu0 0
    %168 = vmatpush1.bf16.msra.mxu0 0
    %169 = vmatprep.subr.bf16.mxu0 0
    %170 = vmatpush1.bf16.msra.mxu0 0
    %171 = vmatprep.subr.bf16.mxu0 0
    %172 = vmatpush1.bf16.msra.mxu0 0
    %173 = vmatprep.subr.bf16.mxu0 0
    %174 = vmatpush1.bf16.msra.mxu0 0
    %175 = vmatprep.subr.bf16.mxu0 0
    %176 = vmatpush1.bf16.msra.mxu0 0
    %177 = vmatprep.subr.bf16.mxu0 0
    %178 = vmatpush1.bf16.msra.mxu0 0
    %179 = vmatprep.subr.bf16.mxu0 0
    %180 = vmatpush1.bf16.msra.mxu0 0
    %181 = vmatprep.subr.bf16.mxu0 0
    %182 = vmatpush1.bf16.msra.mxu0 0
    %183 = vmatprep.subr.bf16.mxu0 0
    %184 = vmatpush1.bf16.msra.mxu0 0
    %185 = vmatprep.subr.bf16.mxu0 0
    %186 = vmatpush1.bf16.msra.mxu0 0
    %187 = vmatprep.subr.bf16.mxu0 0
    %188 = vmatpush1.bf16.msra.mxu0 0
    %189 = vmatprep.subr.bf16.mxu0 0
    %190 = vmatpush1.bf16.msra.mxu0 0
    %191 = vmatprep.mubr.bf16.mxu0 0
    %192 = vmatmul.mubr.bf16.gmra.mrb[0].mxu0 %v132
    %v193 = vpop.f32.mrb[0].mxu0
    %v194 = vadd.f32 %v57, %v193
    %v195 = vpop.f32.mrb[0].mxu0
    %v196 = vadd.f32 %v61, %v195
    %v197 = vpop.f32.mrb[0].mxu0
    %v198 = vpop.f32.mrb[0].mxu0
    %199 = vdwg.mxu0
    %200 = vmatprep.subr.bf16.mxu0 %v145
    %201 = vmatpush1.bf16.msra.mxu0 %v142
    %202 = vmatprep.subr.bf16.mxu0 0
    %203 = vmatpush1.bf16.msra.mxu0 0
    %204 = vmatprep.subr.bf16.mxu0 0
    %205 = vmatpush1.bf16.msra.mxu0 0
    %206 = vmatprep.subr.bf16.mxu0 0
    %207 = vmatpush1.bf16.msra.mxu0 0
    %208 = vmatprep.subr.bf16.mxu0 0
    %209 = vmatpush1.bf16.msra.mxu0 0
    %210 = vmatprep.subr.bf16.mxu0 0
    %211 = vmatpush1.bf16.msra.mxu0 0
    %212 = vmatprep.subr.bf16.mxu0 0
    %213 = vmatpush1.bf16.msra.mxu0 0
    %214 = vmatprep.subr.bf16.mxu0 0
    %215 = vmatpush1.bf16.msra.mxu0 0
    %216 = vmatprep.subr.bf16.mxu0 0
    %217 = vmatpush1.bf16.msra.mxu0 0
    %218 = vmatprep.subr.bf16.mxu0 0
    %219 = vmatpush1.bf16.msra.mxu0 0
    %220 = vmatprep.subr.bf16.mxu0 0
    %221 = vmatpush1.bf16.msra.mxu0 0
    %222 = vmatprep.subr.bf16.mxu0 0
    %223 = vmatpush1.bf16.msra.mxu0 0
    %224 = vmatprep.subr.bf16.mxu0 0
    %225 = vmatpush1.bf16.msra.mxu0 0
    %226 = vmatprep.subr.bf16.mxu0 0
    %227 = vmatpush1.bf16.msra.mxu0 0
    %228 = vmatprep.subr.bf16.mxu0 0
    %229 = vmatpush1.bf16.msra.mxu0 0
    %230 = vmatprep.subr.bf16.mxu0 0
    %231 = vmatpush1.bf16.msra.mxu0 0
    %232 = vmatprep.mubr.bf16.mxu0 0
    %233 = vmatmul.mubr.bf16.gmra.mrb[0].mxu0 %v132
    %v234 = vpop.f32.mrb[0].mxu0
    %v235 = vadd.f32 %v65, %v234
    %v236 = vpop.f32.mrb[0].mxu0
    %v237 = vadd.f32 %v69, %v236
    %v238 = vpop.f32.mrb[0].mxu0
    %v239 = vpop.f32.mrb[0].mxu0
    %240 = vdwg.mxu0
    %241 = vmatprep.subr.bf16.mxu0 %v151
    %242 = vmatpush1.bf16.msra.mxu0 %v148
    %243 = vmatprep.subr.bf16.mxu0 0
    %244 = vmatpush1.bf16.msra.mxu0 0
    %245 = vmatprep.subr.bf16.mxu0 0
    %246 = vmatpush1.bf16.msra.mxu0 0
    %247 = vmatprep.subr.bf16.mxu0 0
    %248 = vmatpush1.bf16.msra.mxu0 0
    %249 = vmatprep.subr.bf16.mxu0 0
    %250 = vmatpush1.bf16.msra.mxu0 0
    %251 = vmatprep.subr.bf16.mxu0 0
    %252 = vmatpush1.bf16.msra.mxu0 0
    %253 = vmatprep.subr.bf16.mxu0 0
    %254 = vmatpush1.bf16.msra.mxu0 0
    %255 = vmatprep.subr.bf16.mxu0 0
    %256 = vmatpush1.bf16.msra.mxu0 0
    %257 = vmatprep.subr.bf16.mxu0 0
    %258 = vmatpush1.bf16.msra.mxu0 0
    %259 = vmatprep.subr.bf16.mxu0 0
    %260 = vmatpush1.bf16.msra.mxu0 0
    %261 = vmatprep.subr.bf16.mxu0 0
    %262 = vmatpush1.bf16.msra.mxu0 0
    %263 = vmatprep.subr.bf16.mxu0 0
    %264 = vmatpush1.bf16.msra.mxu0 0
    %265 = vmatprep.subr.bf16.mxu0 0
    %266 = vmatpush1.bf16.msra.mxu0 0
    %267 = vmatprep.subr.bf16.mxu0 0
    %268 = vmatpush1.bf16.msra.mxu0 0
    %269 = vmatprep.subr.bf16.mxu0 0
    %270 = vmatpush1.bf16.msra.mxu0 0
    %271 = vmatprep.subr.bf16.mxu0 0
    %272 = vmatpush1.bf16.msra.mxu0 0
    %273 = vmatprep.mubr.bf16.mxu0 0
    %274 = vmatmul.mubr.bf16.gmra.mrb[0].mxu0 %v132
    %v275 = vpop.f32.mrb[0].mxu0
    %v276 = vadd.f32 %v73, %v275
    %v277 = vpop.f32.mrb[0].mxu0
    %v278 = vadd.f32 %v77, %v277
    %v279 = vpop.f32.mrb[0].mxu0
    %v280 = vpop.f32.mrb[0].mxu0
    %281 = vdwg.mxu0
    %282 = vmatprep.subr.bf16.mxu0 %v157
    %283 = vmatpush1.bf16.msra.mxu0 %v154
    %284 = vmatprep.subr.bf16.mxu0 0
    %285 = vmatpush1.bf16.msra.mxu0 0
    %286 = vmatprep.subr.bf16.mxu0 0
    %287 = vmatpush1.bf16.msra.mxu0 0
    %288 = vmatprep.subr.bf16.mxu0 0
    %289 = vmatpush1.bf16.msra.mxu0 0
    %290 = vmatprep.subr.bf16.mxu0 0
    %291 = vmatpush1.bf16.msra.mxu0 0
    %292 = vmatprep.subr.bf16.mxu0 0
    %293 = vmatpush1.bf16.msra.mxu0 0
    %294 = vmatprep.subr.bf16.mxu0 0
    %295 = vmatpush1.bf16.msra.mxu0 0
    %296 = vmatprep.subr.bf16.mxu0 0
    %297 = vmatpush1.bf16.msra.mxu0 0
    %298 = vmatprep.subr.bf16.mxu0 0
    %299 = vmatpush1.bf16.msra.mxu0 0
    %300 = vmatprep.subr.bf16.mxu0 0
    %301 = vmatpush1.bf16.msra.mxu0 0
    %302 = vmatprep.subr.bf16.mxu0 0
    %303 = vmatpush1.bf16.msra.mxu0 0
    %304 = vmatprep.subr.bf16.mxu0 0
    %305 = vmatpush1.bf16.msra.mxu0 0
    %306 = vmatprep.subr.bf16.mxu0 0
    %307 = vmatpush1.bf16.msra.mxu0 0
    %308 = vmatprep.subr.bf16.mxu0 0
    %309 = vmatpush1.bf16.msra.mxu0 0
    %310 = vmatprep.subr.bf16.mxu0 0
    %311 = vmatpush1.bf16.msra.mxu0 0
    %312 = vmatprep.subr.bf16.mxu0 0
    %313 = vmatpush1.bf16.msra.mxu0 0
    %314 = vmatprep.mubr.bf16.mxu0 0
    %315 = vmatmul.mubr.bf16.gmra.mrb[0].mxu0 %v132
    %v316 = vpop.f32.mrb[0].mxu0
    %v317 = vadd.f32 %v81, %v316
    %v318 = vpop.f32.mrb[0].mxu0
    %v319 = vadd.f32 %v85, %v318
    %v320 = vpop.f32.mrb[0].mxu0
    %v321 = vpop.f32.mrb[0].mxu0
    %322 = vdwg.mxu0
    %v323 = vmax.f32 %v194, 0.0
    %v324 = vmax.f32 %v196, 0.0
    %v325 = vmax.f32 %v235, 0.0
    %v326 = vmax.f32 %v237, 0.0
    %v327 = vmax.f32 %v276, 0.0
    %v328 = vmax.f32 %v278, 0.0
    %v329 = vmax.f32 %v317, 0.0
    %v330 = vmax.f32 %v319, 0.0
    %v331 = vpack.c.bf16 %v323, %v323
    %v332 = vpack.c.bf16 %v324, %v324
    %v333 = vpack.c.bf16 %v325, %v325
    %v334 = vpack.c.bf16 %v326, %v326
    %v335 = vpack.c.bf16 %v327, %v327
    %v336 = vpack.c.bf16 %v328, %v328
    %v337 = vpack.c.bf16 %v329, %v329
    %v338 = vpack.c.bf16 %v330, %v330
    %v339 = vld [vmem:[#allocation5] sm:$0xf]
    %v340 = vld [vmem:[#allocation5 + $0x4] sm:$0xf]
    %v341 = vld [vmem:[#allocation5 + $0x8] sm:$0xf]
    %v342 = vld [vmem:[#allocation5 + $0xc] sm:$0xf]
    %v343 = vld [vmem:[#allocation5 + $0x10] sm:$0xf]
    %v344 = vld [vmem:[#allocation5 + $0x14] sm:$0xf]
    %v345 = vld [vmem:[#allocation5 + $0x18] sm:$0xf]
    %v346 = vld [vmem:[#allocation5 + $0x1c] sm:$0xf]
    %v347 = vld [vmem:[#allocation5 + $0x20] sm:$0xf]
    %v348 = vld [vmem:[#allocation5 + $0x24] sm:$0xf]
    %v349 = vld [vmem:[#allocation5 + $0x28] sm:$0xf]
    %v350 = vld [vmem:[#allocation5 + $0x2c] sm:$0xf]
    %v351 = vld [vmem:[#allocation5 + $0x30] sm:$0xf]
    %v352 = vld [vmem:[#allocation5 + $0x34] sm:$0xf]
    %v353 = vld [vmem:[#allocation5 + $0x38] sm:$0xf]
    %v354 = vld [vmem:[#allocation5 + $0x3c] sm:$0xf]
    %v355 = vld [vmem:[#allocation5 + $0x40] sm:$0xf]
    %v356 = vld [vmem:[#allocation5 + $0x44] sm:$0xf]
    %v357 = vld [vmem:[#allocation5 + $0x48] sm:$0xf]
    %v358 = vld [vmem:[#allocation5 + $0x4c] sm:$0xf]
    %v359 = vld [vmem:[#allocation5 + $0x50] sm:$0xf]
    %v360 = vld [vmem:[#allocation5 + $0x54] sm:$0xf]
    %v361 = vld [vmem:[#allocation5 + $0x58] sm:$0xf]
    %v362 = vld [vmem:[#allocation5 + $0x5c] sm:$0xf]
    %v363 = vld [vmem:[#allocation5 + $0x60] sm:$0xf]
    %v364 = vld [vmem:[#allocation5 + $0x64] sm:$0xf]
    %v365 = vld [vmem:[#allocation5 + $0x68] sm:$0xf]
    %v366 = vld [vmem:[#allocation5 + $0x6c] sm:$0xf]
    %v367 = vld [vmem:[#allocation5 + $0x70] sm:$0xf]
    %v368 = vld [vmem:[#allocation5 + $0x74] sm:$0xf]
    %v369 = vld [vmem:[#allocation5 + $0x78] sm:$0xf]
    %v370 = vld [vmem:[#allocation5 + $0x7c] sm:$0xf]
    %v371 = vld [vmem:[#allocation5 + $0x80] sm:$0xf]
    %v372 = vld [vmem:[#allocation5 + $0x84] sm:$0xf]
    %v373 = vld [vmem:[#allocation5 + $0x88] sm:$0xf]
    %v374 = vld [vmem:[#allocation5 + $0x8c] sm:$0xf]
    %v375 = vld [vmem:[#allocation5 + $0x90] sm:$0xf]
    %v376 = vld [vmem:[#allocation5 + $0x94] sm:$0xf]
    %v377 = vld [vmem:[#allocation5 + $0x98] sm:$0xf]
    %v378 = vld [vmem:[#allocation5 + $0x9c] sm:$0xf]
    %v379 = vld [vmem:[#allocation5 + $0xa0] sm:$0xf]
    %v380 = vld [vmem:[#allocation5 + $0xa4] sm:$0xf]
    %v381 = vld [vmem:[#allocation5 + $0xa8] sm:$0xf]
    %v382 = vld [vmem:[#allocation5 + $0xac] sm:$0xf]
    %v383 = vld [vmem:[#allocation5 + $0xb0] sm:$0xf]
    %v384 = vld [vmem:[#allocation5 + $0xb4] sm:$0xf]
    %v385 = vld [vmem:[#allocation5 + $0xb8] sm:$0xf]
    %v386 = vld [vmem:[#allocation5 + $0xbc] sm:$0xf]
    %v387 = vld [vmem:[#allocation5 + $0xc0] sm:$0xf]
    %v388 = vld [vmem:[#allocation5 + $0xc4] sm:$0xf]
    %v389 = vld [vmem:[#allocation5 + $0xc8] sm:$0xf]
    %v390 = vld [vmem:[#allocation5 + $0xcc] sm:$0xf]
    %v391 = vld [vmem:[#allocation5 + $0xd0] sm:$0xf]
    %v392 = vld [vmem:[#allocation5 + $0xd4] sm:$0xf]
    %v393 = vld [vmem:[#allocation5 + $0xd8] sm:$0xf]
    %v394 = vld [vmem:[#allocation5 + $0xdc] sm:$0xf]
    %v395 = vld [vmem:[#allocation5 + $0xe0] sm:$0xf]
    %v396 = vld [vmem:[#allocation5 + $0xe4] sm:$0xf]
    %v397 = vld [vmem:[#allocation5 + $0xe8] sm:$0xf]
    %v398 = vld [vmem:[#allocation5 + $0xec] sm:$0xf]
    %v399 = vld [vmem:[#allocation5 + $0xf0] sm:$0xf]
    %v400 = vld [vmem:[#allocation5 + $0xf4] sm:$0xf]
    %v401 = vld [vmem:[#allocation5 + $0xf8] sm:$0xf]
    %v402 = vld [vmem:[#allocation5 + $0xfc] sm:$0xf]
    %v403 = vld [vmem:[#allocation5 + $0x100] sm:$0xf]
    %v404 = vld [vmem:[#allocation5 + $0x104] sm:$0xf]
    %v405 = vld [vmem:[#allocation5 + $0x108] sm:$0xf]
    %v406 = vld [vmem:[#allocation5 + $0x10c] sm:$0xf]
    %v407 = vld [vmem:[#allocation5 + $0x110] sm:$0xf]
    %v408 = vld [vmem:[#allocation5 + $0x114] sm:$0xf]
    %v409 = vld [vmem:[#allocation5 + $0x118] sm:$0xf]
    %v410 = vld [vmem:[#allocation5 + $0x11c] sm:$0xf]
    %v411 = vld [vmem:[#allocation5 + $0x120] sm:$0xf]
    %v412 = vld [vmem:[#allocation5 + $0x124] sm:$0xf]
    %v413 = vld [vmem:[#allocation5 + $0x128] sm:$0xf]
    %v414 = vld [vmem:[#allocation5 + $0x12c] sm:$0xf]
    %v415 = vld [vmem:[#allocation5 + $0x130] sm:$0xf]
    %v416 = vld [vmem:[#allocation5 + $0x134] sm:$0xf]
    %v417 = vld [vmem:[#allocation5 + $0x138] sm:$0xf]
    %v418 = vld [vmem:[#allocation5 + $0x13c] sm:$0xf]
    %v419 = vld [vmem:[#allocation5 + $0x140] sm:$0xf]
    %v420 = vld [vmem:[#allocation5 + $0x144] sm:$0xf]
    %v421 = vld [vmem:[#allocation5 + $0x148] sm:$0xf]
    %v422 = vld [vmem:[#allocation5 + $0x14c] sm:$0xf]
    %v423 = vld [vmem:[#allocation5 + $0x150] sm:$0xf]
    %v424 = vld [vmem:[#allocation5 + $0x154] sm:$0xf]
    %v425 = vld [vmem:[#allocation5 + $0x158] sm:$0xf]
    %v426 = vld [vmem:[#allocation5 + $0x15c] sm:$0xf]
    %v427 = vld [vmem:[#allocation5 + $0x160] sm:$0xf]
    %v428 = vld [vmem:[#allocation5 + $0x164] sm:$0xf]
    %v429 = vld [vmem:[#allocation5 + $0x168] sm:$0xf]
    %v430 = vld [vmem:[#allocation5 + $0x16c] sm:$0xf]
    %v431 = vld [vmem:[#allocation5 + $0x170] sm:$0xf]
    %v432 = vld [vmem:[#allocation5 + $0x174] sm:$0xf]
    %v433 = vld [vmem:[#allocation5 + $0x178] sm:$0xf]
    %v434 = vld [vmem:[#allocation5 + $0x17c] sm:$0xf]
    %v435 = vld [vmem:[#allocation5 + $0x180] sm:$0xf]
    %v436 = vld [vmem:[#allocation5 + $0x184] sm:$0xf]
    %v437 = vld [vmem:[#allocation5 + $0x188] sm:$0xf]
    %v438 = vld [vmem:[#allocation5 + $0x18c] sm:$0xf]
    %v439 = vld [vmem:[#allocation5 + $0x190] sm:$0xf]
    %v440 = vld [vmem:[#allocation5 + $0x194] sm:$0xf]
    %v441 = vld [vmem:[#allocation5 + $0x198] sm:$0xf]
    %v442 = vld [vmem:[#allocation5 + $0x19c] sm:$0xf]
    %v443 = vld [vmem:[#allocation5 + $0x1a0] sm:$0xf]
    %v444 = vld [vmem:[#allocation5 + $0x1a4] sm:$0xf]
    %v445 = vld [vmem:[#allocation5 + $0x1a8] sm:$0xf]
    %v446 = vld [vmem:[#allocation5 + $0x1ac] sm:$0xf]
    %v447 = vld [vmem:[#allocation5 + $0x1b0] sm:$0xf]
    %v448 = vld [vmem:[#allocation5 + $0x1b4] sm:$0xf]
    %v449 = vld [vmem:[#allocation5 + $0x1b8] sm:$0xf]
    %v450 = vld [vmem:[#allocation5 + $0x1bc] sm:$0xf]
    %v451 = vld [vmem:[#allocation5 + $0x1c0] sm:$0xf]
    %v452 = vld [vmem:[#allocation5 + $0x1c4] sm:$0xf]
    %v453 = vld [vmem:[#allocation5 + $0x1c8] sm:$0xf]
    %v454 = vld [vmem:[#allocation5 + $0x1cc] sm:$0xf]
    %v455 = vld [vmem:[#allocation5 + $0x1d0] sm:$0xf]
    %v456 = vld [vmem:[#allocation5 + $0x1d4] sm:$0xf]
    %v457 = vld [vmem:[#allocation5 + $0x1d8] sm:$0xf]
    %v458 = vld [vmem:[#allocation5 + $0x1dc] sm:$0xf]
    %v459 = vld [vmem:[#allocation5 + $0x1e0] sm:$0xf]
    %v460 = vld [vmem:[#allocation5 + $0x1e4] sm:$0xf]
    %v461 = vld [vmem:[#allocation5 + $0x1e8] sm:$0xf]
    %v462 = vld [vmem:[#allocation5 + $0x1ec] sm:$0xf]
    %v463 = vld [vmem:[#allocation5 + $0x1f0] sm:$0xf]
    %v464 = vld [vmem:[#allocation5 + $0x1f4] sm:$0xf]
    %v465 = vld [vmem:[#allocation5 + $0x1f8] sm:$0xf]
    %v466 = vld [vmem:[#allocation5 + $0x1fc] sm:$0xf]
    %v467 = vld [vmem:[%s4] sm:$0x1]
    %v469 = vlaneseq
    %v470 = vshrl.u32 %v469, 7
    %v471 = vsub.s32 0, %v470
    %v472 = vrot.slane %v467, %v471
    %v602 = vunpack.c.l.b16 %v339
    %v603 = vunpack.c.l.b16 %v340
    %v604 = vunpack.c.l.b16 %v341
    %v605 = vunpack.c.l.b16 %v342
    %v606 = vunpack.c.l.b16 %v343
    %v607 = vunpack.c.l.b16 %v344
    %v608 = vunpack.c.l.b16 %v345
    %v609 = vunpack.c.l.b16 %v346
    %v610 = vunpack.c.l.b16 %v347
    %v611 = vunpack.c.l.b16 %v348
    %v612 = vunpack.c.l.b16 %v349
    %v613 = vunpack.c.l.b16 %v350
    %v614 = vunpack.c.l.b16 %v351
    %v615 = vunpack.c.l.b16 %v352
    %v616 = vunpack.c.l.b16 %v353
    %v617 = vunpack.c.l.b16 %v354
    %v618 = vunpack.c.l.b16 %v355
    %v619 = vunpack.c.l.b16 %v356
    %v620 = vunpack.c.l.b16 %v357
    %v621 = vunpack.c.l.b16 %v358
    %v622 = vunpack.c.l.b16 %v359
    %v623 = vunpack.c.l.b16 %v360
    %v624 = vunpack.c.l.b16 %v361
    %v625 = vunpack.c.l.b16 %v362
    %v626 = vunpack.c.l.b16 %v363
    %v627 = vunpack.c.l.b16 %v364
    %v628 = vunpack.c.l.b16 %v365
    %v629 = vunpack.c.l.b16 %v366
    %v630 = vunpack.c.l.b16 %v367
    %v631 = vunpack.c.l.b16 %v368
    %v632 = vunpack.c.l.b16 %v369
    %v633 = vunpack.c.l.b16 %v370
    %v634 = vunpack.c.l.b16 %v371
    %v635 = vunpack.c.l.b16 %v372
    %v636 = vunpack.c.l.b16 %v373
    %v637 = vunpack.c.l.b16 %v374
    %v638 = vunpack.c.l.b16 %v375
    %v639 = vunpack.c.l.b16 %v376
    %v640 = vunpack.c.l.b16 %v377
    %v641 = vunpack.c.l.b16 %v378
    %v642 = vunpack.c.l.b16 %v379
    %v643 = vunpack.c.l.b16 %v380
    %v644 = vunpack.c.l.b16 %v381
    %v645 = vunpack.c.l.b16 %v382
    %v646 = vunpack.c.l.b16 %v383
    %v647 = vunpack.c.l.b16 %v384
    %v648 = vunpack.c.l.b16 %v385
    %v649 = vunpack.c.l.b16 %v386
    %v650 = vunpack.c.l.b16 %v387
    %v651 = vunpack.c.l.b16 %v388
    %v652 = vunpack.c.l.b16 %v389
    %v653 = vunpack.c.l.b16 %v390
    %v654 = vunpack.c.l.b16 %v391
    %v655 = vunpack.c.l.b16 %v392
    %v656 = vunpack.c.l.b16 %v393
    %v657 = vunpack.c.l.b16 %v394
    %v658 = vunpack.c.l.b16 %v395
    %v659 = vunpack.c.l.b16 %v396
    %v660 = vunpack.c.l.b16 %v397
    %v661 = vunpack.c.l.b16 %v398
    %v662 = vunpack.c.l.b16 %v399
    %v663 = vunpack.c.l.b16 %v400
    %v664 = vunpack.c.l.b16 %v401
    %v665 = vunpack.c.l.b16 %v402
    %v666 = vunpack.c.l.b16 %v403
    %v667 = vunpack.c.l.b16 %v404
    %v668 = vunpack.c.l.b16 %v405
    %v669 = vunpack.c.l.b16 %v406
    %v670 = vunpack.c.l.b16 %v407
    %v671 = vunpack.c.l.b16 %v408
    %v672 = vunpack.c.l.b16 %v409
    %v673 = vunpack.c.l.b16 %v410
    %v674 = vunpack.c.l.b16 %v411
    %v675 = vunpack.c.l.b16 %v412
    %v676 = vunpack.c.l.b16 %v413
    %v677 = vunpack.c.l.b16 %v414
    %v678 = vunpack.c.l.b16 %v415
    %v679 = vunpack.c.l.b16 %v416
    %v680 = vunpack.c.l.b16 %v417
    %v681 = vunpack.c.l.b16 %v418
    %v682 = vunpack.c.l.b16 %v419
    %v683 = vunpack.c.l.b16 %v420
    %v684 = vunpack.c.l.b16 %v421
    %v685 = vunpack.c.l.b16 %v422
    %v686 = vunpack.c.l.b16 %v423
    %v687 = vunpack.c.l.b16 %v424
    %v688 = vunpack.c.l.b16 %v425
    %v689 = vunpack.c.l.b16 %v426
    %v690 = vunpack.c.l.b16 %v427
    %v691 = vunpack.c.l.b16 %v428
    %v692 = vunpack.c.l.b16 %v429
    %v693 = vunpack.c.l.b16 %v430
    %v694 = vunpack.c.l.b16 %v431
    %v695 = vunpack.c.l.b16 %v432
    %v696 = vunpack.c.l.b16 %v433
    %v697 = vunpack.c.l.b16 %v434
    %v698 = vunpack.c.l.b16 %v435
    %v699 = vunpack.c.l.b16 %v436
    %v700 = vunpack.c.l.b16 %v437
    %v701 = vunpack.c.l.b16 %v438
    %v702 = vunpack.c.l.b16 %v439
    %v703 = vunpack.c.l.b16 %v440
    %v704 = vunpack.c.l.b16 %v441
    %v705 = vunpack.c.l.b16 %v442
    %v706 = vunpack.c.l.b16 %v443
    %v707 = vunpack.c.l.b16 %v444
    %v708 = vunpack.c.l.b16 %v445
    %v709 = vunpack.c.l.b16 %v446
    %v710 = vunpack.c.l.b16 %v447
    %v711 = vunpack.c.l.b16 %v448
    %v712 = vunpack.c.l.b16 %v449
    %v713 = vunpack.c.l.b16 %v450
    %v714 = vunpack.c.l.b16 %v451
    %v715 = vunpack.c.l.b16 %v452
    %v716 = vunpack.c.l.b16 %v453
    %v717 = vunpack.c.l.b16 %v454
    %v718 = vunpack.c.l.b16 %v455
    %v719 = vunpack.c.l.b16 %v456
    %v720 = vunpack.c.l.b16 %v457
    %v721 = vunpack.c.l.b16 %v458
    %v722 = vunpack.c.l.b16 %v459
    %v723 = vunpack.c.l.b16 %v460
    %v724 = vunpack.c.l.b16 %v461
    %v725 = vunpack.c.l.b16 %v462
    %v726 = vunpack.c.l.b16 %v463
    %v727 = vunpack.c.l.b16 %v464
    %v728 = vunpack.c.l.b16 %v465
    %v729 = vunpack.c.l.b16 %v466
    %v730 = vpack.c.b16 %v603, %v602
    %v731 = vpack.c.b16 %v605, %v604
    %v732 = vpack.c.b16 %v607, %v606
    %v733 = vpack.c.b16 %v609, %v608
    %v734 = vpack.c.b16 %v611, %v610
    %v735 = vpack.c.b16 %v613, %v612
    %v736 = vpack.c.b16 %v615, %v614
    %v737 = vpack.c.b16 %v617, %v616
    %v738 = vpack.c.b16 %v619, %v618
    %v739 = vpack.c.b16 %v621, %v620
    %v740 = vpack.c.b16 %v623, %v622
    %v741 = vpack.c.b16 %v625, %v624
    %v742 = vpack.c.b16 %v627, %v626
    %v743 = vpack.c.b16 %v629, %v628
    %v744 = vpack.c.b16 %v631, %v630
    %v745 = vpack.c.b16 %v633, %v632
    %v746 = vpack.c.b16 %v635, %v634
    %v747 = vpack.c.b16 %v637, %v636
    %v748 = vpack.c.b16 %v639, %v638
    %v749 = vpack.c.b16 %v641, %v640
    %v750 = vpack.c.b16 %v643, %v642
    %v751 = vpack.c.b16 %v645, %v644
    %v752 = vpack.c.b16 %v647, %v646
    %v753 = vpack.c.b16 %v649, %v648
    %v754 = vpack.c.b16 %v651, %v650
    %v755 = vpack.c.b16 %v653, %v652
    %v756 = vpack.c.b16 %v655, %v654
    %v757 = vpack.c.b16 %v657, %v656
    %v758 = vpack.c.b16 %v659, %v658
    %v759 = vpack.c.b16 %v661, %v660
    %v760 = vpack.c.b16 %v663, %v662
    %v761 = vpack.c.b16 %v665, %v664
    %v762 = vpack.c.b16 %v667, %v666
    %v763 = vpack.c.b16 %v669, %v668
    %v764 = vpack.c.b16 %v671, %v670
    %v765 = vpack.c.b16 %v673, %v672
    %v766 = vpack.c.b16 %v675, %v674
    %v767 = vpack.c.b16 %v677, %v676
    %v768 = vpack.c.b16 %v679, %v678
    %v769 = vpack.c.b16 %v681, %v680
    %v770 = vpack.c.b16 %v683, %v682
    %v771 = vpack.c.b16 %v685, %v684
    %v772 = vpack.c.b16 %v687, %v686
    %v773 = vpack.c.b16 %v689, %v688
    %v774 = vpack.c.b16 %v691, %v690
    %v775 = vpack.c.b16 %v693, %v692
    %v776 = vpack.c.b16 %v695, %v694
    %v777 = vpack.c.b16 %v697, %v696
    %v778 = vpack.c.b16 %v699, %v698
    %v779 = vpack.c.b16 %v701, %v700
    %v780 = vpack.c.b16 %v703, %v702
    %v781 = vpack.c.b16 %v705, %v704
    %v782 = vpack.c.b16 %v707, %v706
    %v783 = vpack.c.b16 %v709, %v708
    %v784 = vpack.c.b16 %v711, %v710
    %v785 = vpack.c.b16 %v713, %v712
    %v786 = vpack.c.b16 %v715, %v714
    %v787 = vpack.c.b16 %v717, %v716
    %v788 = vpack.c.b16 %v719, %v718
    %v789 = vpack.c.b16 %v721, %v720
    %v790 = vpack.c.b16 %v723, %v722
    %v791 = vpack.c.b16 %v725, %v724
    %v792 = vpack.c.b16 %v727, %v726
    %v793 = vpack.c.b16 %v729, %v728
    %858 = vmatprep.subr.bf16.mxu0 0
    %859 = vmatpush1.bf16.msra.mxu0 %v730
    %860 = vmatprep.subr.bf16.mxu0 0
    %861 = vmatpush1.bf16.msra.mxu0 %v731
    %862 = vmatprep.subr.bf16.mxu0 0
    %863 = vmatpush1.bf16.msra.mxu0 %v732
    %864 = vmatprep.subr.bf16.mxu0 0
    %865 = vmatpush1.bf16.msra.mxu0 %v733
    %866 = vmatprep.subr.bf16.mxu0 0
    %867 = vmatpush1.bf16.msra.mxu0 %v734
    %868 = vmatprep.subr.bf16.mxu0 0
    %869 = vmatpush1.bf16.msra.mxu0 %v735
    %870 = vmatprep.subr.bf16.mxu0 0
    %871 = vmatpush1.bf16.msra.mxu0 %v736
    %872 = vmatprep.subr.bf16.mxu0 0
    %873 = vmatpush1.bf16.msra.mxu0 %v737
    %874 = vmatprep.subr.bf16.mxu0 0
    %875 = vmatpush1.bf16.msra.mxu0 %v738
    %876 = vmatprep.subr.bf16.mxu0 0
    %877 = vmatpush1.bf16.msra.mxu0 %v739
    %878 = vmatprep.subr.bf16.mxu0 0
    %879 = vmatpush1.bf16.msra.mxu0 %v740
    %880 = vmatprep.subr.bf16.mxu0 0
    %881 = vmatpush1.bf16.msra.mxu0 %v741
    %882 = vmatprep.subr.bf16.mxu0 0
    %883 = vmatpush1.bf16.msra.mxu0 %v742
    %884 = vmatprep.subr.bf16.mxu0 0
    %885 = vmatpush1.bf16.msra.mxu0 %v743
    %886 = vmatprep.subr.bf16.mxu0 0
    %887 = vmatpush1.bf16.msra.mxu0 %v744
    %888 = vmatprep.subr.bf16.mxu0 0
    %889 = vmatpush1.bf16.msra.mxu0 %v745
    %890 = vmatprep.mubr.bf16.mxu0 %v332
    %891 = vmatmul.mubr.bf16.gmra.mrb[0].mxu0 %v331
    %v892 = vpop.f32.mrb[0].mxu0
    %v893 = vadd.f32 %v472, %v892
    %v894 = vpop.f32.mrb[0].mxu0
    %v895 = vpop.f32.mrb[0].mxu0
    %v896 = vpop.f32.mrb[0].mxu0
    %897 = vdwg.mxu0
    %898 = vmatprep.subr.bf16.mxu0 0
    %899 = vmatpush1.bf16.msra.mxu0 %v746
    %900 = vmatprep.subr.bf16.mxu0 0
    %901 = vmatpush1.bf16.msra.mxu0 %v747
    %902 = vmatprep.subr.bf16.mxu0 0
    %903 = vmatpush1.bf16.msra.mxu0 %v748
    %904 = vmatprep.subr.bf16.mxu0 0
    %905 = vmatpush1.bf16.msra.mxu0 %v749
    %906 = vmatprep.subr.bf16.mxu0 0
    %907 = vmatpush1.bf16.msra.mxu0 %v750
    %908 = vmatprep.subr.bf16.mxu0 0
    %909 = vmatpush1.bf16.msra.mxu0 %v751
    %910 = vmatprep.subr.bf16.mxu0 0
    %911 = vmatpush1.bf16.msra.mxu0 %v752
    %912 = vmatprep.subr.bf16.mxu0 0
    %913 = vmatpush1.bf16.msra.mxu0 %v753
    %914 = vmatprep.subr.bf16.mxu0 0
    %915 = vmatpush1.bf16.msra.mxu0 %v754
    %916 = vmatprep.subr.bf16.mxu0 0
    %917 = vmatpush1.bf16.msra.mxu0 %v755
    %918 = vmatprep.subr.bf16.mxu0 0
    %919 = vmatpush1.bf16.msra.mxu0 %v756
    %920 = vmatprep.subr.bf16.mxu0 0
    %921 = vmatpush1.bf16.msra.mxu0 %v757
    %922 = vmatprep.subr.bf16.mxu0 0
    %923 = vmatpush1.bf16.msra.mxu0 %v758
    %924 = vmatprep.subr.bf16.mxu0 0
    %925 = vmatpush1.bf16.msra.mxu0 %v759
    %926 = vmatprep.subr.bf16.mxu0 0
    %927 = vmatpush1.bf16.msra.mxu0 %v760
    %928 = vmatprep.subr.bf16.mxu0 0
    %929 = vmatpush1.bf16.msra.mxu0 %v761
    %930 = vmatprep.mubr.bf16.mxu0 %v334
    %931 = vmatmul.mubr.bf16.gmra.mrb[0].mxu0 %v333
    %v932 = vpop.f32.mrb[0].mxu0
    %v933 = vadd.f32 %v893, %v932
    %v934 = vpop.f32.mrb[0].mxu0
    %v935 = vpop.f32.mrb[0].mxu0
    %v936 = vpop.f32.mrb[0].mxu0
    %937 = vdwg.mxu0
    %938 = vmatprep.subr.bf16.mxu0 0
    %939 = vmatpush1.bf16.msra.mxu0 %v762
    %940 = vmatprep.subr.bf16.mxu0 0
    %941 = vmatpush1.bf16.msra.mxu0 %v763
    %942 = vmatprep.subr.bf16.mxu0 0
    %943 = vmatpush1.bf16.msra.mxu0 %v764
    %944 = vmatprep.subr.bf16.mxu0 0
    %945 = vmatpush1.bf16.msra.mxu0 %v765
    %946 = vmatprep.subr.bf16.mxu0 0
    %947 = vmatpush1.bf16.msra.mxu0 %v766
    %948 = vmatprep.subr.bf16.mxu0 0
    %949 = vmatpush1.bf16.msra.mxu0 %v767
    %950 = vmatprep.subr.bf16.mxu0 0
    %951 = vmatpush1.bf16.msra.mxu0 %v768
    %952 = vmatprep.subr.bf16.mxu0 0
    %953 = vmatpush1.bf16.msra.mxu0 %v769
    %954 = vmatprep.subr.bf16.mxu0 0
    %955 = vmatpush1.bf16.msra.mxu0 %v770
    %956 = vmatprep.subr.bf16.mxu0 0
    %957 = vmatpush1.bf16.msra.mxu0 %v771
    %958 = vmatprep.subr.bf16.mxu0 0
    %959 = vmatpush1.bf16.msra.mxu0 %v772
    %960 = vmatprep.subr.bf16.mxu0 0
    %961 = vmatpush1.bf16.msra.mxu0 %v773
    %962 = vmatprep.subr.bf16.mxu0 0
    %963 = vmatpush1.bf16.msra.mxu0 %v774
    %964 = vmatprep.subr.bf16.mxu0 0
    %965 = vmatpush1.bf16.msra.mxu0 %v775
    %966 = vmatprep.subr.bf16.mxu0 0
    %967 = vmatpush1.bf16.msra.mxu0 %v776
    %968 = vmatprep.subr.bf16.mxu0 0
    %969 = vmatpush1.bf16.msra.mxu0 %v777
    %970 = vmatprep.mubr.bf16.mxu0 %v336
    %971 = vmatmul.mubr.bf16.gmra.mrb[0].mxu0 %v335
    %v972 = vpop.f32.mrb[0].mxu0
    %v973 = vadd.f32 %v933, %v972
    %v974 = vpop.f32.mrb[0].mxu0
    %v975 = vpop.f32.mrb[0].mxu0
    %v976 = vpop.f32.mrb[0].mxu0
    %977 = vdwg.mxu0
    %978 = vmatprep.subr.bf16.mxu0 0
    %979 = vmatpush1.bf16.msra.mxu0 %v778
    %980 = vmatprep.subr.bf16.mxu0 0
    %981 = vmatpush1.bf16.msra.mxu0 %v779
    %982 = vmatprep.subr.bf16.mxu0 0
    %983 = vmatpush1.bf16.msra.mxu0 %v780
    %984 = vmatprep.subr.bf16.mxu0 0
    %985 = vmatpush1.bf16.msra.mxu0 %v781
    %986 = vmatprep.subr.bf16.mxu0 0
    %987 = vmatpush1.bf16.msra.mxu0 %v782
    %988 = vmatprep.subr.bf16.mxu0 0
    %989 = vmatpush1.bf16.msra.mxu0 %v783
    %990 = vmatprep.subr.bf16.mxu0 0
    %991 = vmatpush1.bf16.msra.mxu0 %v784
    %992 = vmatprep.subr.bf16.mxu0 0
    %993 = vmatpush1.bf16.msra.mxu0 %v785
    %994 = vmatprep.subr.bf16.mxu0 0
    %995 = vmatpush1.bf16.msra.mxu0 %v786
    %996 = vmatprep.subr.bf16.mxu0 0
    %997 = vmatpush1.bf16.msra.mxu0 %v787
    %998 = vmatprep.subr.bf16.mxu0 0
    %999 = vmatpush1.bf16.msra.mxu0 %v788
    %1000 = vmatprep.subr.bf16.mxu0 0
    %1001 = vmatpush1.bf16.msra.mxu0 %v789
    %1002 = vmatprep.subr.bf16.mxu0 0
    %1003 = vmatpush1.bf16.msra.mxu0 %v790
    %1004 = vmatprep.subr.bf16.mxu0 0
    %1005 = vmatpush1.bf16.msra.mxu0 %v791
    %1006 = vmatprep.subr.bf16.mxu0 0
    %1007 = vmatpush1.bf16.msra.mxu0 %v792
    %1008 = vmatprep.subr.bf16.mxu0 0
    %1009 = vmatpush1.bf16.msra.mxu0 %v793
    %1010 = vmatprep.mubr.bf16.mxu0 %v338
    %1011 = vmatmul.mubr.bf16.gmra.mrb[0].mxu0 %v337
    %v1012 = vpop.f32.mrb[0].mxu0
    %v1013 = vadd.f32 %v973, %v1012
    %v1014 = vpop.f32.mrb[0].mxu0
    %v1015 = vpop.f32.mrb[0].mxu0
    %v1016 = vpop.f32.mrb[0].mxu0
    %1017 = vdwg.mxu0
    %1018 = vst [vmem:[#allocation7] sm:$0xff] %v1013
    // Predicated region
    $region30: #{tpu_custom_call.1} parent=1 // pred_check
      _
    $region31: #{tpu_custom_call.1} parent=1 // pred_check_branch
      %1020 = sbr.rel (0) target = $region33
    $region32: #{tpu_custom_call.1} parent=1 // pred_region
      %s1022 = ssub.s32 128, 128
      %1023 = vsyncadd [#allocation4], %s1022
      %s1025 = sshll.u32 [#allocation7], 4
      %s1026 = int_to_ptr.vmem [resolvable:$true] %s1025
      %1028 = dma.vmem_to_hbm [thread:$0]  %s1026, 128, %s5, [#allocation4]
    $region33: #{tpu_custom_call.1} parent=1 // pred_fallthru
      _
    // Predicated region
    $region34: #{tpu_custom_call.1} parent=1 // pred_check
      _
    $region35: #{tpu_custom_call.1} parent=1 // pred_check_branch
      %1030 = sbr.rel (0) target = $region37
    $region36: #{tpu_custom_call.1} parent=1 // pred_region
      %1031 = dma.done [#allocation4], 128
    $region37: #{tpu_custom_call.1} parent=1 // pred_fallthru
      _
    %1032 = vsyncpa [#allocation3], 1
    %1033 = vsyncpa [#allocation6], 1
    %1034 = vsyncpa [#allocation4], 1

</llo_original>
